<compile_context>
chip_gen: v5e
topology: v5e:2x2
jax: 0.10.0
libtpu: 0.0.40
codegen_flags: <defaults>
</compile_context>

<pallas_src>
import math

import jax
import jax.numpy as jnp
from jax.experimental import pallas as pl
from jax.experimental.pallas import tpu as pltpu

LAMDA = 1.4
ALPHA = 0.5
L = 1


# ---------------------------------------------------------------------------
# Kernel: one row-tile of nodes, all batches at once.
# ---------------------------------------------------------------------------
def _gcn_kernel(att_ref, xt_ref, h0t_ref, w12_ref, bias_ref, out_ref):
    """
    att_ref : (tm, Np)      bf16  rows of att for this tile        (streamed)
    xt_ref  : (Np, B*F)     bf16  node-major input                 (grid-invariant)
    h0t_ref : (tm, B*F)     bf16  rows of node-major h0            (streamed)
    w12_ref : (2*B*F, B*P)  bf16  stacked folded weights [W1;W2]   (grid-invariant)
    bias_ref: (1, B*P)      f32                                    (grid-invariant)
    out_ref : (tm, B*P)     f32   lane-dense (B*P % 128 == 0)
    """
    # hi = att @ input for every batch in one MXU dot (f32 accumulation).
    hi = jnp.dot(att_ref[...], xt_ref[...], preferred_element_type=jnp.float32)
    # Single fused projection: [hi | h0] @ [W1_big; W2_big]  (K = 2*B*F).
    support = jnp.concatenate([hi.astype(w12_ref.dtype), h0t_ref[...]], axis=-1)
    out = jnp.dot(support, w12_ref[...], preferred_element_type=jnp.float32)
    out_ref[...] = (out + bias_ref[...]).astype(out_ref.dtype)


# ---------------------------------------------------------------------------
# Input-independent parameter folding (hoist this once per layer in a stacked
# GCNII network -- it is pure parameter plumbing, re-materializing it per call
# costs more HBM traffic than the kernel itself at small shapes).
# ---------------------------------------------------------------------------
def fold_gcn_params(weight, bias, batch, *, lamda=LAMDA, alpha=ALPHA, l=L):
    two_f, f_out = weight.shape
    f_in = two_f // 2
    assert two_f == 2 * f_in, "weight must be (2*in_features, out_features)"
    # The (1-theta)*r residual (and this folding) requires out == in features,
    # exactly like the PyTorch module.
    assert f_out == f_in, "GCNII variant layer requires out_features == in_features"

    theta = math.log(lamda / l + 1.0)
    f32 = jnp.float32
    eye = jnp.eye(f_in, dtype=f32)
    w1 = theta * weight[:f_in].astype(f32) + (1.0 - theta) * (1.0 - alpha) * eye
    w2 = theta * weight[f_in:].astype(f32) + (1.0 - theta) * alpha * eye

    # Lane-dense output: pad per-batch width P so batch*P is a multiple of 128
    # (unmasked vst on the output slab; padding sliced off outside).
    step = 128 // math.gcd(batch, 128)
    p = max(f_out, step * ((f_out + step - 1) // step))
    w1 = jnp.pad(w1, ((0, 0), (0, p - f_out)))
    w2 = jnp.pad(w2, ((0, 0), (0, p - f_out)))
    bias_p = jnp.pad(bias.astype(f32), (0, p - f_out))

    # Block-diagonal over batch so the projection is one MXU dot per row tile.
    # Fine at small B; for B >~ 8 switch to a flattened (B*N, F) layout instead
    # of kron (weights scale as B^2 and the MXU burns B x FLOPs on zero blocks).
    eye_b = jnp.eye(batch, dtype=f32)
    w1_big = jnp.kron(eye_b, w1)                      # (B*F, B*P)
    w2_big = jnp.kron(eye_b, w2)                      # (B*F, B*P)
    # Note: folding the (1-theta) identity terms into bf16 weights rounds them to
    # bf16; fine at this tolerance, revisit if stacking very deep GCNII towers.
    w12_big = jnp.concatenate([w1_big, w2_big], axis=0).astype(jnp.bfloat16)
    bias_big = jnp.tile(bias_p, (batch,)).reshape(1, batch * p)  # (1, B*P) f32
    return w12_big, bias_big, p


# ---------------------------------------------------------------------------
# Generation-aware tile selection.
# ---------------------------------------------------------------------------
def _tpu_generation():
    try:
        kind = jax.devices()[0].device_kind.lower()
    except Exception:
        return "unknown"
    if "v7" in kind or "7x" in kind:
        return "v7x"
    if "v6" in kind:
        return "v6e"
    if "v5 lite" in kind or "v5e" in kind or "v5lite" in kind:
        return "v5e"
    return "unknown"


def _round_up(x, m):
    return ((x + m - 1) // m) * m


def _pick_tiling(n, bf, bp, gen):
    """Return (tm, n_pad, vmem_limit_bytes) for the row-tiled grid."""
    if gen == "v7x":
        # 64 MiB physical VMEM, 2 TensorCores -> smaller tiles, >=2 grid steps.
        tm_cap, budget, vmem_limit, min_steps = 256, 44 << 20, 56 << 20, 2
    elif gen in ("v6e", "v5e"):
        # 128 MiB physical VMEM, 1 TC -> big row tiles amortize per-step overhead;
        # raise the scoped limit explicitly (v5e default is only 16 MiB).
        tm_cap, budget, vmem_limit, min_steps = 1024, 80 << 20, 96 << 20, 1
    else:
        tm_cap, budget, vmem_limit, min_steps = 512, 44 << 20, 56 << 20, 1

    n_r = _round_up(n, 8)
    # Streamed, double-buffered operands per output row (bytes):
    #   att row (bf16) + h0 row (bf16) + out row (f32), each x2 buffers.
    per_row = 2 * (2 * n_r) + 2 * (2 * bf) + 2 * (4 * bp)
    # Grid-invariant operands (xt, W12, bias); assume double-buffered so the
    # budget still holds if pl.Buffered(1) is unavailable in this build.
    invariant = 2 * (2 * n_r * bf + 2 * (2 * bf) * bp + 4 * bp)
    if budget > invariant:
        tm_budget = max(8, ((budget - invariant) // per_row) // 8 * 8)
    else:
        # xt alone no longer fits: would need a K-tiled (att-column) reduction
        # axis; out of scope for these shapes.
        tm_budget = 8
    tm_max = max(8, min(tm_cap, tm_budget))

    steps = max(min_steps if n >= 16 else 1, -(-n // tm_max))
    tm = _round_up(-(-n // steps), 8)      # multiple of 8 sublanes
    n_pad = steps * tm                     # rows padded so every tile is full
    return tm, n_pad, vmem_limit


# ---------------------------------------------------------------------------
# Layer wrapper (PyTorch-equivalent interface).
# ---------------------------------------------------------------------------
def graph_convolution(x, h0, att, weight, bias, *, lamda=LAMDA, alpha=ALPHA, l=L):
    """x, h0: (B, N, F_in); att: (N, N); weight: (2*F_in, F_out); bias: (F_out,)."""
    B, N, F_in = x.shape
    F_out = weight.shape[1]

    w12_big, bias_big, P = fold_gcn_params(weight, bias, B,
                                           lamda=lamda, alpha=alpha, l=l)
    BF, BP = B * F_in, B * P

    gen = _tpu_generation()
    tm, N_pad, vmem_limit = _pick_tiling(N, BF, BP, gen)

    # Node-major activations so hi = att @ x is a single (N,N)@(N,B*F) MXU dot.
    # (A stacked GCNII network should keep this layout across layers so these
    #  transposes happen once per network, not per layer.)
    xt = jnp.transpose(x, (1, 0, 2)).reshape(N, BF).astype(jnp.bfloat16)
    h0t = jnp.transpose(h0, (1, 0, 2)).reshape(N, BF).astype(jnp.bfloat16)
    # att is the HBM-dominant streamed operand; bf16 halves its DMA bytes.
    # (On v7x it could be narrowed further to fp8 e4m3 for the att@x dot.)
    att_b = att.astype(jnp.bfloat16)
    if N_pad != N:
        xt = jnp.pad(xt, ((0, N_pad - N), (0, 0)))
        h0t = jnp.pad(h0t, ((0, N_pad - N), (0, 0)))
        att_b = jnp.pad(att_b, ((0, N_pad - N), (0, N_pad - N)))

    grid = (N_pad // tm,)

    def build(single_buffer_invariants):
        def inv_spec(shape):
            if single_buffer_invariants:
                return pl.BlockSpec(shape, lambda i: (0, 0),
                                    pipeline_mode=pl.Buffered(1))
            return pl.BlockSpec(shape, lambda i: (0, 0))

        return pl.pallas_call(
            _gcn_kernel,
            out_shape=jax.ShapeDtypeStruct((N_pad, BP), jnp.float32),
            grid_spec=pltpu.PrefetchScalarGridSpec(
                num_scalar_prefetch=0,
                grid=grid,
                in_specs=[
                    pl.BlockSpec((tm, N_pad), lambda i: (i, 0)),  # att rows (streamed)
                    inv_spec((N_pad, BF)),                        # xt   (grid-invariant)
                    pl.BlockSpec((tm, BF), lambda i: (i, 0)),     # h0 rows (streamed)
                    inv_spec((2 * BF, BP)),                       # W12  (grid-invariant)
                    inv_spec((1, BP)),                            # bias (grid-invariant)
                ],
                out_specs=pl.BlockSpec((tm, BP), lambda i: (i, 0)),
            ),
            compiler_params=pltpu.CompilerParams(
                dimension_semantics=("parallel",),   # shards rows across v7x's 2 TCs
                vmem_limit_bytes=vmem_limit,
            ),
        )

    args = (att_b, xt, h0t, w12_big, bias_big)
    if hasattr(pl, "Buffered"):
        try:
            out_t = build(True)(*args)
        except Exception:
            # pipeline_mode=pl.Buffered(1) not supported by this build: fall back
            # to default double-buffered grid-invariant operands (correct, just
            # uses a bit more VMEM).
            out_t = build(False)(*args)
    else:
        out_t = build(False)(*args)

    # Drop row/lane padding, restore the (B, N, F_out) batch-major layout.
    out = out_t[:N].reshape(N, B, P)[:, :, :F_out].transpose(1, 0, 2)
    return out.astype(x.dtype)


# ---------------------------------------------------------------------------
# References.
# ---------------------------------------------------------------------------
def graph_convolution_ref(x, h0, att, weight, bias, *, lamda=LAMDA, alpha=ALPHA, l=L):
    """Pure f32 JAX reference mirroring the PyTorch forward (variant=True)."""
    theta = math.log(lamda / l + 1.0)
    hi = jnp.einsum("nm,bmf->bnf", att, x)
    support = jnp.concatenate([hi, h0], axis=2)
    r = (1.0 - alpha) * hi + alpha * h0
    out = theta * jnp.einsum("bnf,fo->bno", support, weight) + (1.0 - theta) * r
    return out + bias


def graph_convolution_ref_mixed(x, h0, att, weight, bias, *, lamda=LAMDA, alpha=ALPHA, l=L):
    """Plain-JAX reference with the kernel's exact numerics: bf16 operands,
    f32 accumulation, residual folded into stacked weights, fused projection."""
    B, N, F_in = x.shape
    theta = math.log(lamda / l + 1.0)
    eye = jnp.eye(F_in, dtype=jnp.float32)
    w1 = (theta * weight[:F_in] + (1.0 - theta) * (1.0 - alpha) * eye).astype(jnp.bfloat16)
    w2 = (theta * weight[F_in:] + (1.0 - theta) * alpha * eye).astype(jnp.bfloat16)
    w12 = jnp.concatenate([w1, w2], axis=0)
    xb = x.astype(jnp.bfloat16)
    hb = h0.astype(jnp.bfloat16)
    ab = att.astype(jnp.bfloat16)
    hi = jnp.einsum("nm,bmf->bnf", ab, xb, preferred_element_type=jnp.float32)
    support = jnp.concatenate([hi.astype(jnp.bfloat16), hb], axis=-1)
    out = jnp.einsum("bnf,fo->bno", support, w12, preferred_element_type=jnp.float32)
    return out + bias


if __name__ == "__main__":
    # Small shapes consistent with the module: batch=2, node_n=48,
    # in_features=out_features=32 (the module implicitly requires equality).
    B, node_n, in_features, out_features = 2, 48, 32, 32

    key = jax.random.PRNGKey(0)
    kx, kh, kw, ka, kb = jax.random.split(key, 5)

    x = jax.random.normal(kx, (B, node_n, in_features), dtype=jnp.float32)
    h0 = jax.random.normal(kh, (B, node_n, in_features), dtype=jnp.float32)

    # Deterministic parameter init mirroring reset_parameters():
    # uniform(-stdv, stdv) with stdv = 1/sqrt(out_features).
    stdv = 1.0 / math.sqrt(out_features)
    weight = jax.random.uniform(kw, (2 * in_features, out_features),
                                minval=-stdv, maxval=stdv, dtype=jnp.float32)
    att = jax.random.uniform(ka, (node_n, node_n),
                             minval=-stdv, maxval=stdv, dtype=jnp.float32)
    bias = jax.random.uniform(kb, (out_features,),
                              minval=-stdv, maxval=stdv, dtype=jnp.float32)

    out = jax.block_until_ready(graph_convolution(x, h0, att, weight, bias))
    assert out.shape == (B, node_n, out_features)

    # Tight check vs a reference with the kernel's exact mixed-precision math.
    ref_mixed = graph_convolution_ref_mixed(x, h0, att, weight, bias)
    assert jnp.allclose(out, ref_mixed, atol=5e-3, rtol=5e-3), \
        "mismatch vs bf16-matched reference"

    # Looser check vs the full-f32 PyTorch-equivalent reference (tolerance
    # accounts for the deliberate bf16 cast of matmul operands).
    ref_f32 = graph_convolution_ref(x, h0, att, weight, bias)
    assert jnp.allclose(out, ref_f32, atol=5e-2, rtol=5e-2), \
        "mismatch vs f32 reference"

    print("KERNEL_OK")
</pallas_src>

<mosaic_0001>
module attributes {stable_mosaic.version = 11 : i64} {
  func.func @_gcn_kernel(%arg0: i32, %arg1: memref<48x48xbf16, #tpu.memory_space<vmem>>, %arg2: memref<48x64xbf16, #tpu.memory_space<vmem>>, %arg3: memref<48x64xbf16, #tpu.memory_space<vmem>>, %arg4: memref<128x128xbf16, #tpu.memory_space<vmem>>, %arg5: memref<1x128xf32, #tpu.memory_space<vmem>>, %arg6: memref<48x128xf32, #tpu.memory_space<vmem>>) attributes {dimension_semantics = [#tpu.dimension_semantics<parallel>], iteration_bounds = array<i64: 1>, scalar_prefetch = 0 : i64, scratch_operands = 0 : i64, tpu.core_type = #tpu.core_type<tc>, window_params = [{transform_indices = @transform_0, window_bounds = array<i64: 48, 48>}, {pipeline_mode = #tpu.pipeline_mode<synchronous>, transform_indices = @transform_1, window_bounds = array<i64: 48, 64>}, {transform_indices = @transform_2, window_bounds = array<i64: 48, 64>}, {pipeline_mode = #tpu.pipeline_mode<synchronous>, transform_indices = @transform_3, window_bounds = array<i64: 128, 128>}, {pipeline_mode = #tpu.pipeline_mode<synchronous>, transform_indices = @transform_4, window_bounds = array<i64: 1, 128>}, {transform_indices = @transform_5, window_bounds = array<i64: 48, 128>}]} {
    %c0 = arith.constant 0 : index
    %c0_0 = arith.constant 0 : index
    %0 = vector.load %arg1[%c0, %c0_0] : memref<48x48xbf16, #tpu.memory_space<vmem>>, vector<48x48xbf16>
    %c0_1 = arith.constant 0 : index
    %c0_2 = arith.constant 0 : index
    %1 = vector.load %arg2[%c0_1, %c0_2] : memref<48x64xbf16, #tpu.memory_space<vmem>>, vector<48x64xbf16>
    %cst = arith.constant dense<0.000000e+00> : vector<48x64xf32>
    %2 = tpu.matmul %0, %1, %cst {dimension_numbers = #tpu.dot_dimension_numbers<[1], [0], [0], [1], [0, 0, 1, 1], [], []>} : vector<48x48xbf16>, vector<48x64xbf16>, vector<48x64xf32> -> vector<48x64xf32>
    %3 = arith.truncf %2 : vector<48x64xf32> to vector<48x64xbf16>
    %c0_3 = arith.constant 0 : index
    %c0_4 = arith.constant 0 : index
    %4 = vector.load %arg3[%c0_3, %c0_4] : memref<48x64xbf16, #tpu.memory_space<vmem>>, vector<48x64xbf16>
    %5 = tpu.concatenate %3, %4 in 1 : vector<48x64xbf16>, vector<48x64xbf16> -> vector<48x128xbf16>
    %c0_5 = arith.constant 0 : index
    %c0_6 = arith.constant 0 : index
    %6 = vector.load %arg4[%c0_5, %c0_6] : memref<128x128xbf16, #tpu.memory_space<vmem>>, vector<128x128xbf16>
    %cst_7 = arith.constant dense<0.000000e+00> : vector<48x128xf32>
    %7 = tpu.matmul %5, %6, %cst_7 {dimension_numbers = #tpu.dot_dimension_numbers<[1], [0], [0], [1], [0, 0, 1, 1], [], []>} : vector<48x128xbf16>, vector<128x128xbf16>, vector<48x128xf32> -> vector<48x128xf32>
    %c0_8 = arith.constant 0 : index
    %c0_9 = arith.constant 0 : index
    %8 = vector.load %arg5[%c0_8, %c0_9] : memref<1x128xf32, #tpu.memory_space<vmem>>, vector<1x128xf32>
    %9 = vector.broadcast %8 : vector<1x128xf32> to vector<48x128xf32>
    %10 = arith.addf %7, %9 : vector<48x128xf32>
    %c0_10 = arith.constant 0 : index
    %c0_11 = arith.constant 0 : index
    %11 = vector.load %arg6[%c0_10, %c0_11] : memref<48x128xf32, #tpu.memory_space<vmem>>, vector<48x128xf32>
    tpu.vector_store %arg6[%c0_10, %c0_11], %10 {strides = array<i32>} : memref<48x128xf32, #tpu.memory_space<vmem>>, vector<48x128xf32>,
    return
  }
  func.func @transform_0(%arg0: i32) -> (i32, i32) {
    %c0_i32 = arith.constant 0 : i32
    %c0_i32_0 = arith.constant 0 : i32
    return %arg0, %c0_i32 : i32, i32
  }
  func.func @transform_1(%arg0: i32) -> (i32, i32) {
    %c0_i32 = arith.constant 0 : i32
    %c0_i32_0 = arith.constant 0 : i32
    %c0_i32_1 = arith.constant 0 : i32
    return %c0_i32, %c0_i32_0 : i32, i32
  }
  func.func @transform_2(%arg0: i32) -> (i32, i32) {
    %c0_i32 = arith.constant 0 : i32
    %c0_i32_0 = arith.constant 0 : i32
    return %arg0, %c0_i32 : i32, i32
  }
  func.func @transform_3(%arg0: i32) -> (i32, i32) {
    %c0_i32 = arith.constant 0 : i32
    %c0_i32_0 = arith.constant 0 : i32
    %c0_i32_1 = arith.constant 0 : i32
    return %c0_i32, %c0_i32_0 : i32, i32
  }
  func.func @transform_4(%arg0: i32) -> (i32, i32) {
    %c0_i32 = arith.constant 0 : i32
    %c0_i32_0 = arith.constant 0 : i32
    %c0_i32_1 = arith.constant 0 : i32
    return %c0_i32, %c0_i32_0 : i32, i32
  }
  func.func @transform_5(%arg0: i32) -> (i32, i32) {
    %c0_i32 = arith.constant 0 : i32
    %c0_i32_0 = arith.constant 0 : i32
    return %arg0, %c0_i32 : i32, i32
  }
}

module attributes {stable_mosaic.version = 11 : i64} {
  func.func @_gcn_kernel(%arg0: i32, %arg1: memref<48x48xbf16, #tpu.memory_space<vmem>>, %arg2: memref<48x64xbf16, #tpu.memory_space<vmem>>, %arg3: memref<48x64xbf16, #tpu.memory_space<vmem>>, %arg4: memref<128x128xbf16, #tpu.memory_space<vmem>>, %arg5: memref<1x128xf32, #tpu.memory_space<vmem>>, %arg6: memref<48x128xf32, #tpu.memory_space<vmem>>) attributes {dimension_semantics = [#tpu.dimension_semantics<parallel>], iteration_bounds = array<i64: 1>, scalar_prefetch = 0 : i64, scratch_operands = 0 : i64, tpu.core_type = #tpu.core_type<tc>, window_params = [{transform_indices = @transform_0, window_bounds = array<i64: 48, 48>}, {pipeline_mode = #tpu.pipeline_mode<synchronous>, transform_indices = @transform_1, window_bounds = array<i64: 48, 64>}, {transform_indices = @transform_2, window_bounds = array<i64: 48, 64>}, {pipeline_mode = #tpu.pipeline_mode<synchronous>, transform_indices = @transform_3, window_bounds = array<i64: 128, 128>}, {pipeline_mode = #tpu.pipeline_mode<synchronous>, transform_indices = @transform_4, window_bounds = array<i64: 1, 128>}, {transform_indices = @transform_5, window_bounds = array<i64: 48, 128>}]} {
    %c0 = arith.constant 0 : index
    %c0_0 = arith.constant 0 : index
    %0 = vector.load %arg1[%c0, %c0_0] : memref<48x48xbf16, #tpu.memory_space<vmem>>, vector<48x48xbf16>
    %c0_1 = arith.constant 0 : index
    %c0_2 = arith.constant 0 : index
    %1 = vector.load %arg2[%c0_1, %c0_2] : memref<48x64xbf16, #tpu.memory_space<vmem>>, vector<48x64xbf16>
    %cst = arith.constant dense<0.000000e+00> : vector<48x64xf32>
    %2 = tpu.matmul %0, %1, %cst {dimension_numbers = #tpu.dot_dimension_numbers<[1], [0], [0], [1], [0, 0, 1, 1], [], []>} : vector<48x48xbf16>, vector<48x64xbf16>, vector<48x64xf32> -> vector<48x64xf32>
    %3 = arith.truncf %2 : vector<48x64xf32> to vector<48x64xbf16>
    %c0_3 = arith.constant 0 : index
    %c0_4 = arith.constant 0 : index
    %4 = vector.load %arg3[%c0_3, %c0_4] : memref<48x64xbf16, #tpu.memory_space<vmem>>, vector<48x64xbf16>
    %5 = tpu.concatenate %3, %4 in 1 : vector<48x64xbf16>, vector<48x64xbf16> -> vector<48x128xbf16>
    %c0_5 = arith.constant 0 : index
    %c0_6 = arith.constant 0 : index
    %6 = vector.load %arg4[%c0_5, %c0_6] : memref<128x128xbf16, #tpu.memory_space<vmem>>, vector<128x128xbf16>
    %cst_7 = arith.constant dense<0.000000e+00> : vector<48x128xf32>
    %7 = tpu.matmul %5, %6, %cst_7 {dimension_numbers = #tpu.dot_dimension_numbers<[1], [0], [0], [1], [0, 0, 1, 1], [], []>} : vector<48x128xbf16>, vector<128x128xbf16>, vector<48x128xf32> -> vector<48x128xf32>
    %c0_8 = arith.constant 0 : index
    %c0_9 = arith.constant 0 : index
    %8 = vector.load %arg5[%c0_8, %c0_9] : memref<1x128xf32, #tpu.memory_space<vmem>>, vector<1x128xf32>
    %9 = vector.broadcast %8 : vector<1x128xf32> to vector<48x128xf32>
    %10 = arith.addf %7, %9 : vector<48x128xf32>
    %c0_10 = arith.constant 0 : index
    %c0_11 = arith.constant 0 : index
    %11 = vector.load %arg6[%c0_10, %c0_11] : memref<48x128xf32, #tpu.memory_space<vmem>>, vector<48x128xf32>
    tpu.vector_store %arg6[%c0_10, %c0_11], %10 {strides = array<i32>} : memref<48x128xf32, #tpu.memory_space<vmem>>, vector<48x128xf32>,
    return
  }
  func.func @transform_0(%arg0: i32) -> (i32, i32) {
    %c0_i32 = arith.constant 0 : i32
    %c0_i32_0 = arith.constant 0 : i32
    return %arg0, %c0_i32 : i32, i32
  }
  func.func @transform_1(%arg0: i32) -> (i32, i32) {
    %c0_i32 = arith.constant 0 : i32
    %c0_i32_0 = arith.constant 0 : i32
    %c0_i32_1 = arith.constant 0 : i32
    return %c0_i32, %c0_i32_0 : i32, i32
  }
  func.func @transform_2(%arg0: i32) -> (i32, i32) {
    %c0_i32 = arith.constant 0 : i32
    %c0_i32_0 = arith.constant 0 : i32
    return %arg0, %c0_i32 : i32, i32
  }
  func.func @transform_3(%arg0: i32) -> (i32, i32) {
    %c0_i32 = arith.constant 0 : i32
    %c0_i32_0 = arith.constant 0 : i32
    %c0_i32_1 = arith.constant 0 : i32
    return %c0_i32, %c0_i32_0 : i32, i32
  }
  func.func @transform_4(%arg0: i32) -> (i32, i32) {
    %c0_i32 = arith.constant 0 : i32
    %c0_i32_0 = arith.constant 0 : i32
    %c0_i32_1 = arith.constant 0 : i32
    return %c0_i32, %c0_i32_0 : i32, i32
  }
  func.func @transform_5(%arg0: i32) -> (i32, i32) {
    %c0_i32 = arith.constant 0 : i32
    %c0_i32_0 = arith.constant 0 : i32
    return %arg0, %c0_i32 : i32, i32
  }
}

</mosaic_0001>

<llo_original>
// kernel: tpu_custom_call.1
$region0: #{tpu_custom_call.1}
  #allocation0 [shape = 'u32[]', space=smem, size = 0x4, offset = 0x4, fixed_abs, tag = 'smem constant byte address 0x4 - core index']
  #allocation1 [shape = 'u32[72,128]{1,0:T(1,128)}', space=vmem, size = 0x9000, scoped, tag = 'internal scratch']
  %s0 = inlined_call_operand.hbm [shape: bf16[48,48], index: 0, kind: input, shape index: {}]
  %s1 = inlined_call_operand.hbm [shape: bf16[48,64], index: 1, kind: input, shape index: {}]
  %s2 = inlined_call_operand.hbm [shape: bf16[48,64], index: 2, kind: input, shape index: {}]
  %s3 = inlined_call_operand.hbm [shape: bf16[128,128], index: 3, kind: input, shape index: {}]
  %s4 = inlined_call_operand.vmem [shape: f32[1,128], index: 4, kind: input, shape index: {}]
  %s5 = inlined_call_operand.hbm [shape: f32[48,128], index: 5, kind: output, shape index: {}]
  %s6 = sld [smem:[#allocation0]]
  $region46: #{tpu_custom_call.1} parent=0
    _
  %s8 = ssub.s32 1, %s6
  %s9 = scalar_select 0, %s8, %s6
  $region1: #{tpu_custom_call.1} parent=0
    #allocation2 [shape = 'u8[12288]{0}', space=vmem, size = 0x3000, scoped, tag = 'input window, operand 0, single buffered']
    #allocation3 [shape = 's32[1]{0}', space=sflag, size = 0x4, scoped, tag = 'scoped memory for tpu_custom_call.1']
    #allocation4 [shape = 's32[1]{0}', space=sflag, size = 0x4, scoped, tag = 'scoped memory for tpu_custom_call.1']
    #allocation5 [shape = 'u8[12288]{0}', space=vmem, size = 0x3000, scoped, tag = 'input window, operand 1, single buffered']
    #allocation6 [shape = 's32[1]{0}', space=sflag, size = 0x4, scoped, tag = 'scoped memory for tpu_custom_call.1']
    #allocation7 [shape = 'u8[12288]{0}', space=vmem, size = 0x3000, scoped, tag = 'input window, operand 2, single buffered']
    #allocation8 [shape = 'u8[32768]{0}', space=vmem, size = 0x8000, scoped, tag = 'input window, operand 3, single buffered']
    #allocation9 [shape = 's32[1]{0}', space=sflag, size = 0x4, scoped, tag = 'scoped memory for tpu_custom_call.1']
    #allocation10 [shape = 'u8[24576]{0}', space=vmem, size = 0x6000, scoped, tag = 'output window, operand 0, single buffered']
    %10 = vsyncpa [#allocation3], 0
    %11 = vsyncpa [#allocation6], 0
    %12 = vsyncpa [#allocation9], 0
    %13 = vsyncpa [#allocation4], 0
    // Predicated region
    $region2: #{tpu_custom_call.1} parent=1 // pred_check
      _
    $region3: #{tpu_custom_call.1} parent=1 // pred_check_branch
      %15 = sbr.rel (0) target = $region5
    $region4: #{tpu_custom_call.1} parent=1 // pred_region
      %17 = vsyncadd [#allocation3], 0
      %s18 = sshll.u32 %s0, 4
      %s19 = int_to_ptr.hbm [resolvable:$true] %s18
      %s20 = sshll.u32 [#allocation2], 4
      %s21 = int_to_ptr.vmem [resolvable:$true] %s20
      %26 = dma.hbm_to_vmem [thread:$0]  %s19, 384, %s21, [#allocation3], 64, 64, 4
    $region5: #{tpu_custom_call.1} parent=1 // pred_fallthru
      _
    // Predicated region
    $region6: #{tpu_custom_call.1} parent=1 // pred_check
      _
    $region7: #{tpu_custom_call.1} parent=1 // pred_check_branch
      %28 = sbr.rel (0) target = $region9
    $region8: #{tpu_custom_call.1} parent=1 // pred_region
      %30 = vsyncadd [#allocation6], 0
      %s31 = sshll.u32 %s1, 4
      %s32 = int_to_ptr.hbm [resolvable:$true] %s31
      %s33 = sshll.u32 [#allocation5], 4
      %s34 = int_to_ptr.vmem [resolvable:$true] %s33
      %39 = dma.hbm_to_vmem [thread:$0]  %s32, 384, %s34, [#allocation6], 64, 64, 4
    $region9: #{tpu_custom_call.1} parent=1 // pred_fallthru
      _
    // Predicated region
    $region10: #{tpu_custom_call.1} parent=1 // pred_check
      _
    $region11: #{tpu_custom_call.1} parent=1 // pred_check_branch
      %41 = sbr.rel (0) target = $region13
    $region12: #{tpu_custom_call.1} parent=1 // pred_region
      %43 = vsyncadd [#allocation6], 0
      %s44 = sshll.u32 %s2, 4
      %s45 = int_to_ptr.hbm [resolvable:$true] %s44
      %s46 = sshll.u32 [#allocation7], 4
      %s47 = int_to_ptr.vmem [resolvable:$true] %s46
      %52 = dma.hbm_to_vmem [thread:$0]  %s45, 384, %s47, [#allocation6], 64, 64, 4
    $region13: #{tpu_custom_call.1} parent=1 // pred_fallthru
      _
    // Predicated region
    $region14: #{tpu_custom_call.1} parent=1 // pred_check
      _
    $region15: #{tpu_custom_call.1} parent=1 // pred_check_branch
      %54 = sbr.rel (0) target = $region17
    $region16: #{tpu_custom_call.1} parent=1 // pred_region
      %56 = vsyncadd [#allocation9], 0
      %s57 = sshll.u32 %s3, 4
      %s58 = int_to_ptr.hbm [resolvable:$true] %s57
      %s59 = sshll.u32 [#allocation8], 4
      %s60 = int_to_ptr.vmem [resolvable:$true] %s59
      %65 = dma.hbm_to_vmem [thread:$0]  %s58, 1024, %s60, [#allocation9], 64, 64, 4
    $region17: #{tpu_custom_call.1} parent=1 // pred_fallthru
      _
    // Predicated region
    $region18: #{tpu_custom_call.1} parent=1 // pred_check
      _
    $region19: #{tpu_custom_call.1} parent=1 // pred_check_branch
      %67 = sbr.rel (0) target = $region21
    $region20: #{tpu_custom_call.1} parent=1 // pred_region
      _
    $region21: #{tpu_custom_call.1} parent=1 // pred_fallthru
      _
    // Predicated region
    $region22: #{tpu_custom_call.1} parent=1 // pred_check
      _
    $region23: #{tpu_custom_call.1} parent=1 // pred_check_branch
      %69 = sbr.rel (0) target = $region25
    $region24: #{tpu_custom_call.1} parent=1 // pred_region
      %71 = dma.done [#allocation3], 384
    $region25: #{tpu_custom_call.1} parent=1 // pred_fallthru
      _
    // Predicated region
    $region26: #{tpu_custom_call.1} parent=1 // pred_check
      _
    $region27: #{tpu_custom_call.1} parent=1 // pred_check_branch
      %73 = sbr.rel (0) target = $region29
    $region28: #{tpu_custom_call.1} parent=1 // pred_region
      %75 = dma.done [#allocation6], 384
    $region29: #{tpu_custom_call.1} parent=1 // pred_fallthru
      _
    // Predicated region
    $region30: #{tpu_custom_call.1} parent=1 // pred_check
      _
    $region31: #{tpu_custom_call.1} parent=1 // pred_check_branch
      %77 = sbr.rel (0) target = $region33
    $region32: #{tpu_custom_call.1} parent=1 // pred_region
      %79 = dma.done [#allocation6], 384
    $region33: #{tpu_custom_call.1} parent=1 // pred_fallthru
      _
    // Predicated region
    $region34: #{tpu_custom_call.1} parent=1 // pred_check
      _
    $region35: #{tpu_custom_call.1} parent=1 // pred_check_branch
      %81 = sbr.rel (0) target = $region37
    $region36: #{tpu_custom_call.1} parent=1 // pred_region
      %83 = dma.done [#allocation9], 1024
    $region37: #{tpu_custom_call.1} parent=1 // pred_fallthru
      _
    %v85 = vld [vmem:[#allocation2] sm:$0xf]
    %v86 = vld [vmem:[#allocation2 + $0x4] sm:$0xf]
    %v87 = vld [vmem:[#allocation2 + $0x8] sm:$0xf]
    %v88 = vld [vmem:[#allocation2 + $0xc] sm:$0xf]
    %v89 = vld [vmem:[#allocation2 + $0x10] sm:$0xf]
    %v90 = vld [vmem:[#allocation2 + $0x14] sm:$0xf]
    %v91 = vld [vmem:[#allocation5] sm:$0xf]
    %v92 = vld [vmem:[#allocation5 + $0x4] sm:$0xf]
    %v93 = vld [vmem:[#allocation5 + $0x8] sm:$0xf]
    %v94 = vld [vmem:[#allocation5 + $0xc] sm:$0xf]
    %v95 = vld [vmem:[#allocation5 + $0x10] sm:$0xf]
    %v96 = vld [vmem:[#allocation5 + $0x14] sm:$0xf]
    %v103 = vunpack.c.l.b16 %v85
    %v104 = vunpack.c.l.b16 %v86
    %v105 = vunpack.c.l.b16 %v87
    %v106 = vunpack.c.l.b16 %v88
    %v107 = vunpack.c.l.b16 %v89
    %v108 = vunpack.c.l.b16 %v90
    %v109 = vpack.c.b16 %v104, %v103
    %v110 = vpack.c.b16 %v106, %v105
    %v111 = vpack.c.b16 %v108, %v107
    %v118 = vunpack.c.l.b16 %v91
    %v119 = vunpack.c.l.b16 %v92
    %v120 = vunpack.c.l.b16 %v93
    %v121 = vunpack.c.l.b16 %v94
    %v122 = vunpack.c.l.b16 %v95
    %v123 = vunpack.c.l.b16 %v96
    %v124 = vpack.c.b16 %v119, %v118
    %v125 = vpack.c.b16 %v121, %v120
    %v126 = vpack.c.b16 %v123, %v122
    %vm130 = vcmask 392192
    %v132 = vsel %vm130, %v109, 0
    %v135 = vsel %vm130, %v110, 0
    %v138 = vsel %vm130, %v111, 0
    %140 = vmatpush.bf16.msra.mxu0 0
    %141 = vmatpush.bf16.msra.mxu0 0
    %142 = vmatpush.bf16.msra.mxu0 0
    %143 = vmatpush.bf16.msra.mxu0 0
    %144 = vmatpush.bf16.msra.mxu0 0
    %145 = vmatpush.bf16.msra.mxu0 %v126
    %146 = vmatpush.bf16.msra.mxu0 %v125
    %147 = vmatpush.bf16.msra.mxu0 %v124
    %148 = vmatmul.bf16.gmra.mxu0 %v132
    %v149 = vpop.f32.mrf.mxu0
    %v150 = vadd.f32 0.0, %v149
    %v151 = vpop.f32.mrf.mxu0
    %v152 = vadd.f32 0.0, %v151
    %153 = vmatmul.bf16.gmra.mxu0 %v135
    %v154 = vpop.f32.mrf.mxu0
    %v155 = vadd.f32 0.0, %v154
    %v156 = vpop.f32.mrf.mxu0
    %v157 = vadd.f32 0.0, %v156
    %158 = vmatmul.bf16.gmra.mxu0 %v138
    %v159 = vpop.f32.mrf.mxu0
    %v160 = vadd.f32 0.0, %v159
    %v161 = vpop.f32.mrf.mxu0
    %v162 = vadd.f32 0.0, %v161
    %163 = vdwg.mxu0
    %v164 = vpack.c.bf16 %v150, %v150
    %v165 = vpack.c.bf16 %v152, %v152
    %v166 = vpack.c.bf16 %v155, %v155
    %v167 = vpack.c.bf16 %v157, %v157
    %v168 = vpack.c.bf16 %v160, %v160
    %v169 = vpack.c.bf16 %v162, %v162
    %v170 = vld [vmem:[#allocation7] sm:$0xf]
    %v171 = vld [vmem:[#allocation7 + $0x4] sm:$0xf]
    %v172 = vld [vmem:[#allocation7 + $0x8] sm:$0xf]
    %v173 = vld [vmem:[#allocation7 + $0xc] sm:$0xf]
    %v174 = vld [vmem:[#allocation7 + $0x10] sm:$0xf]
    %v175 = vld [vmem:[#allocation7 + $0x14] sm:$0xf]
    %v182 = vunpack.c.l.b16 %v164
    %v183 = vunpack.c.l.b16 %v165
    %v184 = vunpack.c.l.b16 %v166
    %v185 = vunpack.c.l.b16 %v167
    %v186 = vunpack.c.l.b16 %v168
    %v187 = vunpack.c.l.b16 %v169
    %v188 = vpack.c.b16 %v183, %v182
    %v189 = vpack.c.b16 %v185, %v184
    %v190 = vpack.c.b16 %v187, %v186
    %v197 = vunpack.c.l.b16 %v170
    %v198 = vunpack.c.l.b16 %v171
    %v199 = vunpack.c.l.b16 %v172
    %v200 = vunpack.c.l.b16 %v173
    %v201 = vunpack.c.l.b16 %v174
    %v202 = vunpack.c.l.b16 %v175
    %v203 = vpack.c.b16 %v198, %v197
    %v204 = vpack.c.b16 %v200, %v199
    %v205 = vpack.c.b16 %v202, %v201
    %206 = vrot.lane.b32.xlu0 %v203, 64
    %v207 = vpop.permute.xlu0 %206
    %208 = vrot.lane.b32.xlu0 %v204, 64
    %v209 = vpop.permute.xlu0 %208
    %210 = vrot.lane.b32.xlu0 %v205, 64
    %v211 = vpop.permute.xlu0 %210
    %vm212 = vcmask 523264
    %v215 = vsel %vm212, %v188, %v207
    %v219 = vsel %vm212, %v189, %v209
    %v223 = vsel %vm212, %v190, %v211
    %v225 = vld [vmem:[#allocation8] sm:$0xf]
    %v226 = vld [vmem:[#allocation8 + $0x4] sm:$0xf]
    %v227 = vld [vmem:[#allocation8 + $0x8] sm:$0xf]
    %v228 = vld [vmem:[#allocation8 + $0xc] sm:$0xf]
    %v229 = vld [vmem:[#allocation8 + $0x10] sm:$0xf]
    %v230 = vld [vmem:[#allocation8 + $0x14] sm:$0xf]
    %v231 = vld [vmem:[#allocation8 + $0x18] sm:$0xf]
    %v232 = vld [vmem:[#allocation8 + $0x1c] sm:$0xf]
    %v233 = vld [vmem:[#allocation8 + $0x20] sm:$0xf]
    %v234 = vld [vmem:[#allocation8 + $0x24] sm:$0xf]
    %v235 = vld [vmem:[#allocation8 + $0x28] sm:$0xf]
    %v236 = vld [vmem:[#allocation8 + $0x2c] sm:$0xf]
    %v237 = vld [vmem:[#allocation8 + $0x30] sm:$0xf]
    %v238 = vld [vmem:[#allocation8 + $0x34] sm:$0xf]
    %v239 = vld [vmem:[#allocation8 + $0x38] sm:$0xf]
    %v240 = vld [vmem:[#allocation8 + $0x3c] sm:$0xf]
    %v241 = vld [vmem:[%s4] sm:$0x1]
    %v243 = vperm.slane %v241, 0
    %v261 = vunpack.c.l.b16 %v225
    %v262 = vunpack.c.l.b16 %v226
    %v263 = vunpack.c.l.b16 %v227
    %v264 = vunpack.c.l.b16 %v228
    %v265 = vunpack.c.l.b16 %v229
    %v266 = vunpack.c.l.b16 %v230
    %v267 = vunpack.c.l.b16 %v231
    %v268 = vunpack.c.l.b16 %v232
    %v269 = vunpack.c.l.b16 %v233
    %v270 = vunpack.c.l.b16 %v234
    %v271 = vunpack.c.l.b16 %v235
    %v272 = vunpack.c.l.b16 %v236
    %v273 = vunpack.c.l.b16 %v237
    %v274 = vunpack.c.l.b16 %v238
    %v275 = vunpack.c.l.b16 %v239
    %v276 = vunpack.c.l.b16 %v240
    %v277 = vpack.c.b16 %v262, %v261
    %v278 = vpack.c.b16 %v264, %v263
    %v279 = vpack.c.b16 %v266, %v265
    %v280 = vpack.c.b16 %v268, %v267
    %v281 = vpack.c.b16 %v270, %v269
    %v282 = vpack.c.b16 %v272, %v271
    %v283 = vpack.c.b16 %v274, %v273
    %v284 = vpack.c.b16 %v276, %v275
    %293 = vmatpush.bf16.msra.mxu0 %v284
    %294 = vmatpush.bf16.msra.mxu0 %v283
    %295 = vmatpush.bf16.msra.mxu0 %v282
    %296 = vmatpush.bf16.msra.mxu0 %v281
    %297 = vmatpush.bf16.msra.mxu0 %v280
    %298 = vmatpush.bf16.msra.mxu0 %v279
    %299 = vmatpush.bf16.msra.mxu0 %v278
    %300 = vmatpush.bf16.msra.mxu0 %v277
    %301 = vmatmul.bf16.gmra.mxu0 %v215
    %v302 = vpop.f32.mrf.mxu0
    %v303 = vadd.f32 %v243, %v302
    %v304 = vpop.f32.mrf.mxu0
    %v305 = vadd.f32 %v243, %v304
    %306 = vmatmul.bf16.gmra.mxu0 %v219
    %v307 = vpop.f32.mrf.mxu0
    %v308 = vadd.f32 %v243, %v307
    %v309 = vpop.f32.mrf.mxu0
    %v310 = vadd.f32 %v243, %v309
    %311 = vmatmul.bf16.gmra.mxu0 %v223
    %v312 = vpop.f32.mrf.mxu0
    %v313 = vadd.f32 %v243, %v312
    %v314 = vpop.f32.mrf.mxu0
    %v315 = vadd.f32 %v243, %v314
    %316 = vdwg.mxu0
    %317 = vst [vmem:[#allocation10] sm:$0xff] %v303
    %318 = vst [vmem:[#allocation10 + $0x8] sm:$0xff] %v305
    %319 = vst [vmem:[#allocation10 + $0x10] sm:$0xff] %v308
    %320 = vst [vmem:[#allocation10 + $0x18] sm:$0xff] %v310
    %321 = vst [vmem:[#allocation10 + $0x20] sm:$0xff] %v313
    %322 = vst [vmem:[#allocation10 + $0x28] sm:$0xff] %v315
    // Predicated region
    $region38: #{tpu_custom_call.1} parent=1 // pred_check
      _
    $region39: #{tpu_custom_call.1} parent=1 // pred_check_branch
      %324 = sbr.rel (0) target = $region41
    $region40: #{tpu_custom_call.1} parent=1 // pred_region
      %326 = vsyncadd [#allocation4], 0
      %s327 = sshll.u32 [#allocation10], 4
      %s328 = int_to_ptr.vmem [resolvable:$true] %s327
      %s329 = sshll.u32 %s5, 4
      %s330 = int_to_ptr.hbm [resolvable:$true] %s329
      %335 = dma.vmem_to_hbm [thread:$0]  %s328, 768, %s330, [#allocation4], 128, 128, 8
    $region41: #{tpu_custom_call.1} parent=1 // pred_fallthru
      _
    // Predicated region
    $region42: #{tpu_custom_call.1} parent=1 // pred_check
      _
    $region43: #{tpu_custom_call.1} parent=1 // pred_check_branch
      %337 = sbr.rel (0) target = $region45
    $region44: #{tpu_custom_call.1} parent=1 // pred_region
      %339 = dma.done [#allocation4], 768
    $region45: #{tpu_custom_call.1} parent=1 // pred_fallthru
      _
    %340 = vsyncpa [#allocation3], 1
    %341 = vsyncpa [#allocation6], 1
    %342 = vsyncpa [#allocation9], 1
    %343 = vsyncpa [#allocation4], 1

// kernel: tpu_custom_call.1
$region0: #{tpu_custom_call.1}
  #allocation0 [shape = 'u32[]', space=smem, size = 0x4, offset = 0x4, fixed_abs, tag = 'smem constant byte address 0x4 - core index']
  #allocation1 [shape = 'u32[72,128]{1,0:T(1,128)}', space=vmem, size = 0x9000, scoped, tag = 'internal scratch']
  %s0 = inlined_call_operand.hbm [shape: bf16[48,48], index: 0, kind: input, shape index: {}]
  %s1 = inlined_call_operand.hbm [shape: bf16[48,64], index: 1, kind: input, shape index: {}]
  %s2 = inlined_call_operand.hbm [shape: bf16[48,64], index: 2, kind: input, shape index: {}]
  %s3 = inlined_call_operand.hbm [shape: bf16[128,128], index: 3, kind: input, shape index: {}]
  %s4 = inlined_call_operand.vmem [shape: f32[1,128], index: 4, kind: input, shape index: {}]
  %s5 = inlined_call_operand.hbm [shape: f32[48,128], index: 5, kind: output, shape index: {}]
  %s6 = sld [smem:[#allocation0]]
  $region46: #{tpu_custom_call.1} parent=0
    _
  %s8 = ssub.s32 1, %s6
  %s9 = scalar_select 0, %s8, %s6
  $region1: #{tpu_custom_call.1} parent=0
    #allocation2 [shape = 'u8[12288]{0}', space=vmem, size = 0x3000, scoped, tag = 'input window, operand 0, single buffered']
    #allocation3 [shape = 's32[1]{0}', space=sflag, size = 0x4, scoped, tag = 'scoped memory for tpu_custom_call.1']
    #allocation4 [shape = 's32[1]{0}', space=sflag, size = 0x4, scoped, tag = 'scoped memory for tpu_custom_call.1']
    #allocation5 [shape = 'u8[12288]{0}', space=vmem, size = 0x3000, scoped, tag = 'input window, operand 1, single buffered']
    #allocation6 [shape = 's32[1]{0}', space=sflag, size = 0x4, scoped, tag = 'scoped memory for tpu_custom_call.1']
    #allocation7 [shape = 'u8[12288]{0}', space=vmem, size = 0x3000, scoped, tag = 'input window, operand 2, single buffered']
    #allocation8 [shape = 'u8[32768]{0}', space=vmem, size = 0x8000, scoped, tag = 'input window, operand 3, single buffered']
    #allocation9 [shape = 's32[1]{0}', space=sflag, size = 0x4, scoped, tag = 'scoped memory for tpu_custom_call.1']
    #allocation10 [shape = 'u8[24576]{0}', space=vmem, size = 0x6000, scoped, tag = 'output window, operand 0, single buffered']
    %10 = vsyncpa [#allocation3], 0
    %11 = vsyncpa [#allocation6], 0
    %12 = vsyncpa [#allocation9], 0
    %13 = vsyncpa [#allocation4], 0
    // Predicated region
    $region2: #{tpu_custom_call.1} parent=1 // pred_check
      _
    $region3: #{tpu_custom_call.1} parent=1 // pred_check_branch
      %15 = sbr.rel (0) target = $region5
    $region4: #{tpu_custom_call.1} parent=1 // pred_region
      %17 = vsyncadd [#allocation3], 0
      %s18 = sshll.u32 %s0, 4
      %s19 = int_to_ptr.hbm [resolvable:$true] %s18
      %s20 = sshll.u32 [#allocation2], 4
      %s21 = int_to_ptr.vmem [resolvable:$true] %s20
      %26 = dma.hbm_to_vmem [thread:$0]  %s19, 384, %s21, [#allocation3], 64, 64, 4
    $region5: #{tpu_custom_call.1} parent=1 // pred_fallthru
      _
    // Predicated region
    $region6: #{tpu_custom_call.1} parent=1 // pred_check
      _
    $region7: #{tpu_custom_call.1} parent=1 // pred_check_branch
      %28 = sbr.rel (0) target = $region9
    $region8: #{tpu_custom_call.1} parent=1 // pred_region
      %30 = vsyncadd [#allocation6], 0
      %s31 = sshll.u32 %s1, 4
      %s32 = int_to_ptr.hbm [resolvable:$true] %s31
      %s33 = sshll.u32 [#allocation5], 4
      %s34 = int_to_ptr.vmem [resolvable:$true] %s33
      %39 = dma.hbm_to_vmem [thread:$0]  %s32, 384, %s34, [#allocation6], 64, 64, 4
    $region9: #{tpu_custom_call.1} parent=1 // pred_fallthru
      _
    // Predicated region
    $region10: #{tpu_custom_call.1} parent=1 // pred_check
      _
    $region11: #{tpu_custom_call.1} parent=1 // pred_check_branch
      %41 = sbr.rel (0) target = $region13
    $region12: #{tpu_custom_call.1} parent=1 // pred_region
      %43 = vsyncadd [#allocation6], 0
      %s44 = sshll.u32 %s2, 4
      %s45 = int_to_ptr.hbm [resolvable:$true] %s44
      %s46 = sshll.u32 [#allocation7], 4
      %s47 = int_to_ptr.vmem [resolvable:$true] %s46
      %52 = dma.hbm_to_vmem [thread:$0]  %s45, 384, %s47, [#allocation6], 64, 64, 4
    $region13: #{tpu_custom_call.1} parent=1 // pred_fallthru
      _
    // Predicated region
    $region14: #{tpu_custom_call.1} parent=1 // pred_check
      _
    $region15: #{tpu_custom_call.1} parent=1 // pred_check_branch
      %54 = sbr.rel (0) target = $region17
    $region16: #{tpu_custom_call.1} parent=1 // pred_region
      %56 = vsyncadd [#allocation9], 0
      %s57 = sshll.u32 %s3, 4
      %s58 = int_to_ptr.hbm [resolvable:$true] %s57
      %s59 = sshll.u32 [#allocation8], 4
      %s60 = int_to_ptr.vmem [resolvable:$true] %s59
      %65 = dma.hbm_to_vmem [thread:$0]  %s58, 1024, %s60, [#allocation9], 64, 64, 4
    $region17: #{tpu_custom_call.1} parent=1 // pred_fallthru
      _
    // Predicated region
    $region18: #{tpu_custom_call.1} parent=1 // pred_check
      _
    $region19: #{tpu_custom_call.1} parent=1 // pred_check_branch
      %67 = sbr.rel (0) target = $region21
    $region20: #{tpu_custom_call.1} parent=1 // pred_region
      _
    $region21: #{tpu_custom_call.1} parent=1 // pred_fallthru
      _
    // Predicated region
    $region22: #{tpu_custom_call.1} parent=1 // pred_check
      _
    $region23: #{tpu_custom_call.1} parent=1 // pred_check_branch
      %69 = sbr.rel (0) target = $region25
    $region24: #{tpu_custom_call.1} parent=1 // pred_region
      %71 = dma.done [#allocation3], 384
    $region25: #{tpu_custom_call.1} parent=1 // pred_fallthru
      _
    // Predicated region
    $region26: #{tpu_custom_call.1} parent=1 // pred_check
      _
    $region27: #{tpu_custom_call.1} parent=1 // pred_check_branch
      %73 = sbr.rel (0) target = $region29
    $region28: #{tpu_custom_call.1} parent=1 // pred_region
      %75 = dma.done [#allocation6], 384
    $region29: #{tpu_custom_call.1} parent=1 // pred_fallthru
      _
    // Predicated region
    $region30: #{tpu_custom_call.1} parent=1 // pred_check
      _
    $region31: #{tpu_custom_call.1} parent=1 // pred_check_branch
      %77 = sbr.rel (0) target = $region33
    $region32: #{tpu_custom_call.1} parent=1 // pred_region
      %79 = dma.done [#allocation6], 384
    $region33: #{tpu_custom_call.1} parent=1 // pred_fallthru
      _
    // Predicated region
    $region34: #{tpu_custom_call.1} parent=1 // pred_check
      _
    $region35: #{tpu_custom_call.1} parent=1 // pred_check_branch
      %81 = sbr.rel (0) target = $region37
    $region36: #{tpu_custom_call.1} parent=1 // pred_region
      %83 = dma.done [#allocation9], 1024
    $region37: #{tpu_custom_call.1} parent=1 // pred_fallthru
      _
    %v85 = vld [vmem:[#allocation2] sm:$0xf]
    %v86 = vld [vmem:[#allocation2 + $0x4] sm:$0xf]
    %v87 = vld [vmem:[#allocation2 + $0x8] sm:$0xf]
    %v88 = vld [vmem:[#allocation2 + $0xc] sm:$0xf]
    %v89 = vld [vmem:[#allocation2 + $0x10] sm:$0xf]
    %v90 = vld [vmem:[#allocation2 + $0x14] sm:$0xf]
    %v91 = vld [vmem:[#allocation5] sm:$0xf]
    %v92 = vld [vmem:[#allocation5 + $0x4] sm:$0xf]
    %v93 = vld [vmem:[#allocation5 + $0x8] sm:$0xf]
    %v94 = vld [vmem:[#allocation5 + $0xc] sm:$0xf]
    %v95 = vld [vmem:[#allocation5 + $0x10] sm:$0xf]
    %v96 = vld [vmem:[#allocation5 + $0x14] sm:$0xf]
    %v103 = vunpack.c.l.b16 %v85
    %v104 = vunpack.c.l.b16 %v86
    %v105 = vunpack.c.l.b16 %v87
    %v106 = vunpack.c.l.b16 %v88
    %v107 = vunpack.c.l.b16 %v89
    %v108 = vunpack.c.l.b16 %v90
    %v109 = vpack.c.b16 %v104, %v103
    %v110 = vpack.c.b16 %v106, %v105
    %v111 = vpack.c.b16 %v108, %v107
    %v118 = vunpack.c.l.b16 %v91
    %v119 = vunpack.c.l.b16 %v92
    %v120 = vunpack.c.l.b16 %v93
    %v121 = vunpack.c.l.b16 %v94
    %v122 = vunpack.c.l.b16 %v95
    %v123 = vunpack.c.l.b16 %v96
    %v124 = vpack.c.b16 %v119, %v118
    %v125 = vpack.c.b16 %v121, %v120
    %v126 = vpack.c.b16 %v123, %v122
    %vm130 = vcmask 392192
    %v132 = vsel %vm130, %v109, 0
    %v135 = vsel %vm130, %v110, 0
    %v138 = vsel %vm130, %v111, 0
    %140 = vmatpush.bf16.msra.mxu0 0
    %141 = vmatpush.bf16.msra.mxu0 0
    %142 = vmatpush.bf16.msra.mxu0 0
    %143 = vmatpush.bf16.msra.mxu0 0
    %144 = vmatpush.bf16.msra.mxu0 0
    %145 = vmatpush.bf16.msra.mxu0 %v126
    %146 = vmatpush.bf16.msra.mxu0 %v125
    %147 = vmatpush.bf16.msra.mxu0 %v124
    %148 = vmatmul.bf16.gmra.mxu0 %v132
    %v149 = vpop.f32.mrf.mxu0
    %v150 = vadd.f32 0.0, %v149
    %v151 = vpop.f32.mrf.mxu0
    %v152 = vadd.f32 0.0, %v151
    %153 = vmatmul.bf16.gmra.mxu0 %v135
    %v154 = vpop.f32.mrf.mxu0
    %v155 = vadd.f32 0.0, %v154
    %v156 = vpop.f32.mrf.mxu0
    %v157 = vadd.f32 0.0, %v156
    %158 = vmatmul.bf16.gmra.mxu0 %v138
    %v159 = vpop.f32.mrf.mxu0
    %v160 = vadd.f32 0.0, %v159
    %v161 = vpop.f32.mrf.mxu0
    %v162 = vadd.f32 0.0, %v161
    %163 = vdwg.mxu0
    %v164 = vpack.c.bf16 %v150, %v150
    %v165 = vpack.c.bf16 %v152, %v152
    %v166 = vpack.c.bf16 %v155, %v155
    %v167 = vpack.c.bf16 %v157, %v157
    %v168 = vpack.c.bf16 %v160, %v160
    %v169 = vpack.c.bf16 %v162, %v162
    %v170 = vld [vmem:[#allocation7] sm:$0xf]
    %v171 = vld [vmem:[#allocation7 + $0x4] sm:$0xf]
    %v172 = vld [vmem:[#allocation7 + $0x8] sm:$0xf]
    %v173 = vld [vmem:[#allocation7 + $0xc] sm:$0xf]
    %v174 = vld [vmem:[#allocation7 + $0x10] sm:$0xf]
    %v175 = vld [vmem:[#allocation7 + $0x14] sm:$0xf]
    %v182 = vunpack.c.l.b16 %v164
    %v183 = vunpack.c.l.b16 %v165
    %v184 = vunpack.c.l.b16 %v166
    %v185 = vunpack.c.l.b16 %v167
    %v186 = vunpack.c.l.b16 %v168
    %v187 = vunpack.c.l.b16 %v169
    %v188 = vpack.c.b16 %v183, %v182
    %v189 = vpack.c.b16 %v185, %v184
    %v190 = vpack.c.b16 %v187, %v186
    %v197 = vunpack.c.l.b16 %v170
    %v198 = vunpack.c.l.b16 %v171
    %v199 = vunpack.c.l.b16 %v172
    %v200 = vunpack.c.l.b16 %v173
    %v201 = vunpack.c.l.b16 %v174
    %v202 = vunpack.c.l.b16 %v175
    %v203 = vpack.c.b16 %v198, %v197
    %v204 = vpack.c.b16 %v200, %v199
    %v205 = vpack.c.b16 %v202, %v201
    %206 = vrot.lane.b32.xlu0 %v203, 64
    %v207 = vpop.permute.xlu0 %206
    %208 = vrot.lane.b32.xlu0 %v204, 64
    %v209 = vpop.permute.xlu0 %208
    %210 = vrot.lane.b32.xlu0 %v205, 64
    %v211 = vpop.permute.xlu0 %210
    %vm212 = vcmask 523264
    %v215 = vsel %vm212, %v188, %v207
    %v219 = vsel %vm212, %v189, %v209
    %v223 = vsel %vm212, %v190, %v211
    %v225 = vld [vmem:[#allocation8] sm:$0xf]
    %v226 = vld [vmem:[#allocation8 + $0x4] sm:$0xf]
    %v227 = vld [vmem:[#allocation8 + $0x8] sm:$0xf]
    %v228 = vld [vmem:[#allocation8 + $0xc] sm:$0xf]
    %v229 = vld [vmem:[#allocation8 + $0x10] sm:$0xf]
    %v230 = vld [vmem:[#allocation8 + $0x14] sm:$0xf]
    %v231 = vld [vmem:[#allocation8 + $0x18] sm:$0xf]
    %v232 = vld [vmem:[#allocation8 + $0x1c] sm:$0xf]
    %v233 = vld [vmem:[#allocation8 + $0x20] sm:$0xf]
    %v234 = vld [vmem:[#allocation8 + $0x24] sm:$0xf]
    %v235 = vld [vmem:[#allocation8 + $0x28] sm:$0xf]
    %v236 = vld [vmem:[#allocation8 + $0x2c] sm:$0xf]
    %v237 = vld [vmem:[#allocation8 + $0x30] sm:$0xf]
    %v238 = vld [vmem:[#allocation8 + $0x34] sm:$0xf]
    %v239 = vld [vmem:[#allocation8 + $0x38] sm:$0xf]
    %v240 = vld [vmem:[#allocation8 + $0x3c] sm:$0xf]
    %v241 = vld [vmem:[%s4] sm:$0x1]
    %v243 = vperm.slane %v241, 0
    %v261 = vunpack.c.l.b16 %v225
    %v262 = vunpack.c.l.b16 %v226
    %v263 = vunpack.c.l.b16 %v227
    %v264 = vunpack.c.l.b16 %v228
    %v265 = vunpack.c.l.b16 %v229
    %v266 = vunpack.c.l.b16 %v230
    %v267 = vunpack.c.l.b16 %v231
    %v268 = vunpack.c.l.b16 %v232
    %v269 = vunpack.c.l.b16 %v233
    %v270 = vunpack.c.l.b16 %v234
    %v271 = vunpack.c.l.b16 %v235
    %v272 = vunpack.c.l.b16 %v236
    %v273 = vunpack.c.l.b16 %v237
    %v274 = vunpack.c.l.b16 %v238
    %v275 = vunpack.c.l.b16 %v239
    %v276 = vunpack.c.l.b16 %v240
    %v277 = vpack.c.b16 %v262, %v261
    %v278 = vpack.c.b16 %v264, %v263
    %v279 = vpack.c.b16 %v266, %v265
    %v280 = vpack.c.b16 %v268, %v267
    %v281 = vpack.c.b16 %v270, %v269
    %v282 = vpack.c.b16 %v272, %v271
    %v283 = vpack.c.b16 %v274, %v273
    %v284 = vpack.c.b16 %v276, %v275
    %293 = vmatpush.bf16.msra.mxu0 %v284
    %294 = vmatpush.bf16.msra.mxu0 %v283
    %295 = vmatpush.bf16.msra.mxu0 %v282
    %296 = vmatpush.bf16.msra.mxu0 %v281
    %297 = vmatpush.bf16.msra.mxu0 %v280
    %298 = vmatpush.bf16.msra.mxu0 %v279
    %299 = vmatpush.bf16.msra.mxu0 %v278
    %300 = vmatpush.bf16.msra.mxu0 %v277
    %301 = vmatmul.bf16.gmra.mxu0 %v215
    %v302 = vpop.f32.mrf.mxu0
    %v303 = vadd.f32 %v243, %v302
    %v304 = vpop.f32.mrf.mxu0
    %v305 = vadd.f32 %v243, %v304
    %306 = vmatmul.bf16.gmra.mxu0 %v219
    %v307 = vpop.f32.mrf.mxu0
    %v308 = vadd.f32 %v243, %v307
    %v309 = vpop.f32.mrf.mxu0
    %v310 = vadd.f32 %v243, %v309
    %311 = vmatmul.bf16.gmra.mxu0 %v223
    %v312 = vpop.f32.mrf.mxu0
    %v313 = vadd.f32 %v243, %v312
    %v314 = vpop.f32.mrf.mxu0
    %v315 = vadd.f32 %v243, %v314
    %316 = vdwg.mxu0
    %317 = vst [vmem:[#allocation10] sm:$0xff] %v303
    %318 = vst [vmem:[#allocation10 + $0x8] sm:$0xff] %v305
    %319 = vst [vmem:[#allocation10 + $0x10] sm:$0xff] %v308
    %320 = vst [vmem:[#allocation10 + $0x18] sm:$0xff] %v310
    %321 = vst [vmem:[#allocation10 + $0x20] sm:$0xff] %v313
    %322 = vst [vmem:[#allocation10 + $0x28] sm:$0xff] %v315
    // Predicated region
    $region38: #{tpu_custom_call.1} parent=1 // pred_check
      _
    $region39: #{tpu_custom_call.1} parent=1 // pred_check_branch
      %324 = sbr.rel (0) target = $region41
    $region40: #{tpu_custom_call.1} parent=1 // pred_region
      %326 = vsyncadd [#allocation4], 0
      %s327 = sshll.u32 [#allocation10], 4
      %s328 = int_to_ptr.vmem [resolvable:$true] %s327
      %s329 = sshll.u32 %s5, 4
      %s330 = int_to_ptr.hbm [resolvable:$true] %s329
      %335 = dma.vmem_to_hbm [thread:$0]  %s328, 768, %s330, [#allocation4], 128, 128, 8
    $region41: #{tpu_custom_call.1} parent=1 // pred_fallthru
      _
    // Predicated region
    $region42: #{tpu_custom_call.1} parent=1 // pred_check
      _
    $region43: #{tpu_custom_call.1} parent=1 // pred_check_branch
      %337 = sbr.rel (0) target = $region45
    $region44: #{tpu_custom_call.1} parent=1 // pred_region
      %339 = dma.done [#allocation4], 768
    $region45: #{tpu_custom_call.1} parent=1 // pred_fallthru
      _
    %340 = vsyncpa [#allocation3], 1
    %341 = vsyncpa [#allocation6], 1
    %342 = vsyncpa [#allocation9], 1
    %343 = vsyncpa [#allocation4], 1

</llo_original>
